<compile_context>
chip_gen: v7x
topology: tpu7x:2x2x1
jax: 0.10.0
libtpu: 0.0.40
codegen_flags: <defaults>
</compile_context>

<pallas_src>
import jax
import jax.numpy as jnp
from jax.experimental import pallas as pl
from jax.experimental.pallas import tpu as pltpu

IN_FEATURES = 4
OUT_FEATURES = 3
SUBLANES = 8     # f32 vreg sublane count
LANES = 128      # vreg lane count


def linear_add_kernel(x_ref, wt_ref, bo_ref, o_ref):
    # x_ref:  (IN,)        in SMEM  (scalar reads, no lane-extract from a vreg)
    # wt_ref: (8, 128)     in VMEM  (w.T zero-padded; rows 0..IN-1 / lanes 0..OUT-1 valid)
    # bo_ref: (1, 128)     in VMEM  (bias + other, zero-padded, pre-folded)
    # o_ref:  (8, 128)     in VMEM  (row 0, lanes 0..OUT-1 hold the result)
    acc = bo_ref[...]                                   # (1, 128) — start from bias+other
    for k in range(IN_FEATURES):                        # static unroll: 4 VPU FMAs, no MXU
        acc = acc + x_ref[k] * wt_ref[k:k + 1, :]       # scalar * (1, 128)
    o_ref[...] = jnp.broadcast_to(acc, o_ref.shape)     # lane-dense, unmasked store


def prepare_params(w, b, other):
    """One-time parameter prep (call once, reuse on every forward).

    w     : (OUT, IN)  PyTorch Linear layout
    b     : (OUT,)
    other : (OUT,)     the module's undefined global, materialized as a constant
    Returns (wt_pad, bo_pad) — padded, kernel-ready operands.
    """
    w_t = jnp.asarray(w, jnp.float32).T                           # (IN, OUT)
    wt_pad = jnp.zeros((SUBLANES, LANES), jnp.float32)
    wt_pad = wt_pad.at[:IN_FEATURES, :OUT_FEATURES].set(w_t)

    bo = (jnp.asarray(b, jnp.float32) + jnp.asarray(other, jnp.float32)).reshape(-1)
    bo_pad = jnp.zeros((1, LANES), jnp.float32)
    bo_pad = bo_pad.at[0, :OUT_FEATURES].set(bo)
    return wt_pad, bo_pad


@jax.jit
def linear_add_prepared(x, wt_pad, bo_pad):
    """v2 = x @ w.T + bias + other for a single 1-D x of shape (IN,).

    Per-call path: one pallas_call + one static slice; all padding/transpose
    work lives in prepare_params().
    """
    flops = 2 * IN_FEATURES * OUT_FEATURES
    bytes_accessed = 4 * (x.size + wt_pad.size + bo_pad.size + SUBLANES * LANES)

    out_pad = pl.pallas_call(
        linear_add_kernel,
        out_shape=jax.ShapeDtypeStruct((SUBLANES, LANES), jnp.float32),
        in_specs=[
            pl.BlockSpec(memory_space=pltpu.SMEM),   # x scalars
            pl.BlockSpec(memory_space=pltpu.VMEM),   # padded weight^T
            pl.BlockSpec(memory_space=pltpu.VMEM),   # padded bias+other
        ],
        out_specs=pl.BlockSpec(memory_space=pltpu.VMEM),
        cost_estimate=pl.CostEstimate(
            flops=flops, transcendentals=0, bytes_accessed=bytes_accessed
        ),
    )(x, wt_pad, bo_pad)

    # Match the module's API: 1-D input (4,) -> 1-D output (3,).
    return out_pad[0, :OUT_FEATURES]


def linear_add(x, w, b, other):
    """Convenience one-shot wrapper (prep + kernel)."""
    wt_pad, bo_pad = prepare_params(w, b, other)
    return linear_add_prepared(x, wt_pad, bo_pad)


if __name__ == "__main__":
    key = jax.random.PRNGKey(0)
    k_x, k_w, k_b, k_o = jax.random.split(key, 4)

    # Module input: x1 = torch.randn(4)  -> 1-D shape (4,)
    x = jax.random.normal(k_x, (IN_FEATURES,), dtype=jnp.float32)

    # Deterministic "checkpoint-free" parameters (Linear(4, 3) shapes).
    w = jax.random.normal(k_w, (OUT_FEATURES, IN_FEATURES), dtype=jnp.float32) * 0.5
    b = jax.random.normal(k_b, (OUT_FEATURES,), dtype=jnp.float32) * 0.1

    # The undefined global `other`, chosen deterministically (broadcast-compatible).
    other = jax.random.normal(k_o, (OUT_FEATURES,), dtype=jnp.float32)

    # One-time parameter prep, then the (jitted) per-call path.
    wt_pad, bo_pad = jax.block_until_ready(prepare_params(w, b, other))

    out = linear_add_prepared(x, wt_pad, bo_pad)
    jax.block_until_ready(out)

    # Reference check in plain JAX (also the recommended production path at
    # this problem size).
    ref = x @ w.T + b + other
    assert out.shape == (OUT_FEATURES,), out.shape
    assert jnp.allclose(out, ref, atol=1e-5, rtol=1e-5), (out, ref)

    print("KERNEL_OK")
</pallas_src>

<mosaic_0001>
module attributes {stable_mosaic.version = 11 : i64} {
  func.func @linear_add_kernel(%arg0: memref<4xf32, #tpu.memory_space<smem>>, %arg1: memref<8x128xf32, #tpu.memory_space<vmem>>, %arg2: memref<1x128xf32, #tpu.memory_space<vmem>>, %arg3: memref<8x128xf32, #tpu.memory_space<vmem>>) attributes {dimension_semantics = [], scalar_prefetch = 0 : i64, scratch_operands = 0 : i64, tpu.core_type = #tpu.core_type<tc>} {
    %c0 = arith.constant 0 : index
    %c0_0 = arith.constant 0 : index
    %0 = vector.load %arg2[%c0, %c0_0] : memref<1x128xf32, #tpu.memory_space<vmem>>, vector<1x128xf32>
    %c0_1 = arith.constant 0 : index
    %1 = memref.load %arg0[%c0_1] : memref<4xf32, #tpu.memory_space<smem>>
    %c0_2 = arith.constant 0 : index
    %c0_3 = arith.constant 0 : index
    %2 = vector.load %arg1[%c0_2, %c0_3] : memref<8x128xf32, #tpu.memory_space<vmem>>, vector<1x128xf32>
    %3 = vector.broadcast %1 : f32 to vector<1x128xf32>
    %4 = arith.mulf %3, %2 : vector<1x128xf32>
    %5 = arith.addf %0, %4 : vector<1x128xf32>
    %c1 = arith.constant 1 : index
    %6 = memref.load %arg0[%c1] : memref<4xf32, #tpu.memory_space<smem>>
    %c1_4 = arith.constant 1 : index
    %c0_5 = arith.constant 0 : index
    %7 = vector.load %arg1[%c1_4, %c0_5] : memref<8x128xf32, #tpu.memory_space<vmem>>, vector<1x128xf32>
    %8 = vector.broadcast %6 : f32 to vector<1x128xf32>
    %9 = arith.mulf %8, %7 : vector<1x128xf32>
    %10 = arith.addf %5, %9 : vector<1x128xf32>
    %c2 = arith.constant 2 : index
    %11 = memref.load %arg0[%c2] : memref<4xf32, #tpu.memory_space<smem>>
    %c2_6 = arith.constant 2 : index
    %c0_7 = arith.constant 0 : index
    %12 = vector.load %arg1[%c2_6, %c0_7] : memref<8x128xf32, #tpu.memory_space<vmem>>, vector<1x128xf32>
    %13 = vector.broadcast %11 : f32 to vector<1x128xf32>
    %14 = arith.mulf %13, %12 : vector<1x128xf32>
    %15 = arith.addf %10, %14 : vector<1x128xf32>
    %c3 = arith.constant 3 : index
    %16 = memref.load %arg0[%c3] : memref<4xf32, #tpu.memory_space<smem>>
    %c3_8 = arith.constant 3 : index
    %c0_9 = arith.constant 0 : index
    %17 = vector.load %arg1[%c3_8, %c0_9] : memref<8x128xf32, #tpu.memory_space<vmem>>, vector<1x128xf32>
    %18 = vector.broadcast %16 : f32 to vector<1x128xf32>
    %19 = arith.mulf %18, %17 : vector<1x128xf32>
    %20 = arith.addf %15, %19 : vector<1x128xf32>
    %21 = vector.shape_cast %20 : vector<1x128xf32> to vector<1x128xf32>
    %22 = vector.broadcast %21 : vector<1x128xf32> to vector<8x128xf32>
    %c0_10 = arith.constant 0 : index
    %c0_11 = arith.constant 0 : index
    %23 = vector.load %arg3[%c0_10, %c0_11] : memref<8x128xf32, #tpu.memory_space<vmem>>, vector<8x128xf32>
    tpu.vector_store %arg3[%c0_10, %c0_11], %22 {strides = array<i32>} : memref<8x128xf32, #tpu.memory_space<vmem>>, vector<8x128xf32>,
    return
  }
}

</mosaic_0001>

<llo_original>
// kernel: linear_add_prepared.1
$region0: #{linear_add_prepared.1}
  #allocation0 [shape = 'u32[]', space=smem, size = 0x4, offset = 0x4, fixed_abs, tag = 'smem constant byte address 0x4 - core index']
  #allocation1 [shape = 'u32[144,128]{1,0:T(1,128)}', space=vmem, size = 0x12000, scoped, tag = 'internal scratch']
  %s0 = inlined_call_operand.hbm [shape: f32[4], index: 0, kind: input, shape index: {}]
  %s1 = inlined_call_operand.hbm [shape: f32[8,128], index: 1, kind: input, shape index: {}]
  %s2 = inlined_call_operand.vmem [shape: f32[1,128], index: 2, kind: input, shape index: {}]
  %s3 = inlined_call_operand.vmem [shape: f32[8,128], index: 3, kind: output, shape index: {}]
  %s4 = sld [smem:[#allocation0]]
  $region30: #{linear_add_prepared.1} parent=0
    _
  %s6 = ssub.s32 1, %s4
  %s7 = scalar_select 0, %s6, %s4
  $region1: #{linear_add_prepared.1} parent=0
    #allocation2 [shape = 'u8[512]{0}', space=smem, size = 0x200, scoped, tag = 'input window, operand 0, single buffered']
    #allocation3 [shape = 's32[1]{0}', space=sflag, size = 0x4, scoped, tag = 'scoped memory for linear_add_prepared.1']
    #allocation4 [shape = 's32[1]{0}', space=sflag, size = 0x4, scoped, tag = 'scoped memory for linear_add_prepared.1']
    #allocation5 [shape = 'u8[4096]{0}', space=vmem, size = 0x1000, scoped, tag = 'input window, operand 1, single buffered']
    %8 = vsyncpa [#allocation4], 0
    %9 = vsyncpa [#allocation3], 0
    // Predicated region
    $region2: #{linear_add_prepared.1} parent=1 // pred_check
      _
    $region3: #{linear_add_prepared.1} parent=1 // pred_check_branch
      %11 = sbr.rel (0) target = $region5
    $region4: #{linear_add_prepared.1} parent=1 // pred_region
      %s13 = ssub.s32 16, 16
      %14 = vsyncadd [#allocation4], %s13
      %17 = dma.hbm_to_smem %s0, 16, [#allocation2], [#allocation4]
    $region5: #{linear_add_prepared.1} parent=1 // pred_fallthru
      _
    // Predicated region
    $region6: #{linear_add_prepared.1} parent=1 // pred_check
      _
    $region7: #{linear_add_prepared.1} parent=1 // pred_check_branch
      %19 = sbr.rel (0) target = $region9
    $region8: #{linear_add_prepared.1} parent=1 // pred_region
      %s21 = ssub.s32 128, 128
      %22 = vsyncadd [#allocation3], %s21
      %s24 = sshll.u32 [#allocation5], 4
      %s25 = int_to_ptr.vmem [resolvable:$true] %s24
      %27 = dma.hbm_to_vmem [thread:$0]  %s1, 128, %s25, [#allocation3]
    $region9: #{linear_add_prepared.1} parent=1 // pred_fallthru
      _
    // Predicated region
    $region10: #{linear_add_prepared.1} parent=1 // pred_check
      _
    $region11: #{linear_add_prepared.1} parent=1 // pred_check_branch
      %29 = sbr.rel (0) target = $region13
    $region12: #{linear_add_prepared.1} parent=1 // pred_region
      _
    $region13: #{linear_add_prepared.1} parent=1 // pred_fallthru
      _
    // Predicated region
    $region14: #{linear_add_prepared.1} parent=1 // pred_check
      _
    $region15: #{linear_add_prepared.1} parent=1 // pred_check_branch
      %31 = sbr.rel (0) target = $region17
    $region16: #{linear_add_prepared.1} parent=1 // pred_region
      %32 = dma.done [#allocation4], 16
    $region17: #{linear_add_prepared.1} parent=1 // pred_fallthru
      _
    // Predicated region
    $region18: #{linear_add_prepared.1} parent=1 // pred_check
      _
    $region19: #{linear_add_prepared.1} parent=1 // pred_check_branch
      %34 = sbr.rel (0) target = $region21
    $region20: #{linear_add_prepared.1} parent=1 // pred_region
      %35 = dma.done [#allocation3], 128
    $region21: #{linear_add_prepared.1} parent=1 // pred_fallthru
      _
    %36 = sfence
    %v37 = vld [vmem:[%s2] sm:$0x1]
    %s38 = sld [smem:[#allocation2]]
    %v39 = vld [vmem:[#allocation5] sm:$0x1]
    %v40 = vstv %s38
    %v41 = vmul.f32 %v40, %v39
    %v42 = vadd.f32 %v37, %v41
    %s43 = sld [smem:[#allocation2 + $0x1]]
    %v44 = vld [vmem:[#allocation5 + $0x1] sm:$0x1]
    %v45 = vstv %s43
    %v46 = vmul.f32 %v45, %v44
    %v47 = vadd.f32 %v42, %v46
    %s48 = sld [smem:[#allocation2 + $0x2]]
    %v49 = vld [vmem:[#allocation5 + $0x2] sm:$0x1]
    %v50 = vstv %s48
    %v51 = vmul.f32 %v50, %v49
    %v52 = vadd.f32 %v47, %v51
    %s53 = sld [smem:[#allocation2 + $0x3]]
    %v54 = vld [vmem:[#allocation5 + $0x3] sm:$0x1]
    %v55 = vstv %s53
    %v56 = vmul.f32 %v55, %v54
    %v57 = vadd.f32 %v52, %v56
    %v59 = vlaneseq
    %v60 = vshrl.u32 %v59, 7
    %v61 = vsub.s32 0, %v60
    %v62 = vrot.slane %v57, %v61
    %64 = vst [vmem:[%s3] sm:$0xff] %v62
    // Predicated region
    $region22: #{linear_add_prepared.1} parent=1 // pred_check
      _
    $region23: #{linear_add_prepared.1} parent=1 // pred_check_branch
      %66 = sbr.rel (0) target = $region25
    $region24: #{linear_add_prepared.1} parent=1 // pred_region
      _
    $region25: #{linear_add_prepared.1} parent=1 // pred_fallthru
      _
    // Predicated region
    $region26: #{linear_add_prepared.1} parent=1 // pred_check
      _
    $region27: #{linear_add_prepared.1} parent=1 // pred_check_branch
      %68 = sbr.rel (0) target = $region29
    $region28: #{linear_add_prepared.1} parent=1 // pred_region
      _
    $region29: #{linear_add_prepared.1} parent=1 // pred_fallthru
      _
    %69 = vsyncpa [#allocation3], 1
    %70 = vsyncpa [#allocation4], 1

</llo_original>
